<compile_context>
chip_gen: v6e
topology: v6e:2x2x1
jax: 0.10.0
libtpu: 0.0.40
codegen_flags: <defaults>
</compile_context>

<pallas_src>
import jax
import jax.numpy as jnp
import numpy as np
from jax.experimental import pallas as pl
from jax.experimental.pallas import tpu as pltpu


# ----------------------------- Pallas kernel ------------------------------ #
def _fused_matmul_kernel(q_ref, w_ref, o_ref):
    # One lane-dense MXU matmul: (tm, 2*n*d) @ (2*n*d, n_pad) -> (tm, n_pad).
    o_ref[...] = jnp.dot(q_ref[...], w_ref[...],
                         preferred_element_type=jnp.float32)


# --------------------------- fused-weight builder -------------------------- #
def _build_fused_weights(rel_height, rel_width, n, n_pad):
    """Constant (2*n*d, n_pad) weight folding the matmul + rel_to_abs selection
    for both the width and the height path."""
    d = rel_width.shape[1]
    c = jnp.arange(n)
    j = jnp.arange(9)
    # rel_to_abs(x, 9)[..., c, j] == x[..., c, n-1-c+j]; indices stay in [0, n+7].
    sel = (n - 1) - c[:, None] + j[None, :]                  # (n, 9)

    def block_diag(rel_k):                                   # rel_k: (n+8, d)
        win = rel_k[sel]                                     # (n, 9, d): [c, j, dd]
        blk = jnp.transpose(win, (2, 0, 1))                  # (d, n, 9): [dd, c, j]
        eye = jnp.eye(n, dtype=rel_k.dtype)
        # w4[c', dd, c, j] = delta(c', c) * rel_k[n-1-c+j, dd]
        w4 = eye[:, None, :, None] * blk[None, :, :, :]      # (n, d, n, 9)
        return w4.reshape(n * d, n * 9)

    w = jnp.concatenate([block_diag(rel_width), block_diag(rel_height)], axis=0)
    return jnp.pad(w, ((0, 0), (0, n_pad - n * 9)))          # (2*n*d, n_pad)


# ------------------------------ JAX wrapper -------------------------------- #
@jax.jit
def rel_pos_emb_forward(q, rel_height, rel_width):
    """q: (B, heads, X, Y, D) with X == Y.  Returns (B, heads*X, Y, 9) float32."""
    B, H, X, Y, D = q.shape
    assert X == Y, "RelPosEmb forward (as in the PyTorch module) needs a square fmap"
    n, d = X, D
    G = B * H
    M = G * n                        # one matmul row per (batch, head, x)
    K = 2 * n * d                    # width half | height half along contraction
    n_out = n * 9
    n_pad = ((n_out + 127) // 128) * 128   # lane-dense (unmasked) output stores

    # ---- wrapper-side data prep (tiny, plain XLA ops) ----------------------
    qg = q.reshape(G, n, n, d)
    qt = jnp.swapaxes(qg, 1, 2)      # height path needs q[b,h, c, a, :]
    qcat = jnp.concatenate(
        [qg.reshape(G, n, n * d), qt.reshape(G, n, n * d)], axis=-1
    ).reshape(M, K).astype(jnp.float32)

    w = _build_fused_weights(rel_height.astype(jnp.float32),
                             rel_width.astype(jnp.float32), n, n_pad)

    # ---- grid: 2 parallel row-blocks (v7x dual TC); 1 if M is too small ----
    ng = 2 if (M % 16 == 0) else 1
    tm = M // ng

    out = pl.pallas_call(
        _fused_matmul_kernel,
        out_shape=jax.ShapeDtypeStruct((M, n_pad), jnp.float32),
        grid=(ng,),
        in_specs=[
            pl.BlockSpec((tm, K), lambda g: (g, 0)),
            pl.BlockSpec((K, n_pad), lambda g: (0, 0)),   # weights stay resident
        ],
        out_specs=pl.BlockSpec((tm, n_pad), lambda g: (g, 0)),
        compiler_params=pltpu.CompilerParams(dimension_semantics=("parallel",)),
    )(qcat, w)

    # PyTorch: rearrange 'b h x y r -> b (h x) y r'  =>  (B, heads*n, n, 9)
    return out[:, :n_out].reshape(B, H, n, n, 9).reshape(B, H * n, n, 9)


# --------------------- pure-JAX reference (PyTorch port) ------------------- #
def _rel_to_abs_ref(x, s):
    b, h, l, c = x.shape
    x = jnp.concatenate([x, jnp.zeros((b, h, l, 1), x.dtype)], axis=3)
    flat_x = x.reshape(b, h, l * (c + 1))
    flat_x = jnp.concatenate([flat_x, jnp.zeros((b, h, s - 1), x.dtype)], axis=2)
    final = flat_x.reshape(b, h, l + 1, s + l - 1)
    return final[:, :, :l, l - 1:]


def _relative_logits_1d_ref(q, rel_k):
    b, heads, h, w, dim = q.shape
    logits = jnp.einsum('bhxyd,rd->bhxyr', q, rel_k)
    logits = logits.reshape(b, heads * h, w, logits.shape[-1])
    return _rel_to_abs_ref(logits, 9)


def rel_pos_emb_ref(q, rel_height, rel_width):
    rel_logits_w = _relative_logits_1d_ref(q, rel_width)
    qT = jnp.swapaxes(q, 2, 3)
    rel_logits_h = _relative_logits_1d_ref(qT, rel_height)
    return rel_logits_w + rel_logits_h


# ---------------------------------- main ----------------------------------- #
if __name__ == "__main__":
    key = jax.random.PRNGKey(0)
    B, heads, fmap_size, dim_head = 2, 4, 8, 32
    n, d = fmap_size, dim_head
    scale = d ** (-0.5)

    k1, k2, k3 = jax.random.split(key, 3)
    # nn.Parameter(torch.randn(fmap + 9 - 1, dim_head) * scale), deterministic init
    rel_height = jax.random.normal(k1, (n + 8, d), dtype=jnp.float32) * scale
    rel_width = jax.random.normal(k2, (n + 8, d), dtype=jnp.float32) * scale
    q = jax.random.normal(k3, (B, heads, n, n, d), dtype=jnp.float32)

    out = rel_pos_emb_forward(q, rel_height, rel_width)
    out = jax.block_until_ready(out)

    ref = rel_pos_emb_ref(q, rel_height, rel_width)
    assert out.shape == ref.shape == (B, heads * n, n, 9)
    np.testing.assert_allclose(np.asarray(out), np.asarray(ref), rtol=1e-5, atol=1e-5)

    print("KERNEL_OK")
</pallas_src>

<mosaic_0001>
module attributes {stable_mosaic.version = 11 : i64} {
  func.func @_fused_matmul_kernel(%arg0: i32, %arg1: memref<32x512xf32, #tpu.memory_space<vmem>>, %arg2: memref<512x128xf32, #tpu.memory_space<vmem>>, %arg3: memref<32x128xf32, #tpu.memory_space<vmem>>) attributes {dimension_semantics = [#tpu.dimension_semantics<parallel>], iteration_bounds = array<i64: 2>, scalar_prefetch = 0 : i64, scratch_operands = 0 : i64, tpu.core_type = #tpu.core_type<tc>, window_params = [{transform_indices = @transform_0, window_bounds = array<i64: 32, 512>}, {pipeline_mode = #tpu.pipeline_mode<synchronous>, transform_indices = @transform_1, window_bounds = array<i64: 512, 128>}, {transform_indices = @transform_2, window_bounds = array<i64: 32, 128>}]} {
    %c0 = arith.constant 0 : index
    %c0_0 = arith.constant 0 : index
    %0 = vector.load %arg1[%c0, %c0_0] : memref<32x512xf32, #tpu.memory_space<vmem>>, vector<32x512xf32>
    %c0_1 = arith.constant 0 : index
    %c0_2 = arith.constant 0 : index
    %1 = vector.load %arg2[%c0_1, %c0_2] : memref<512x128xf32, #tpu.memory_space<vmem>>, vector<512x128xf32>
    %cst = arith.constant dense<0.000000e+00> : vector<32x128xf32>
    %2 = tpu.matmul %0, %1, %cst {dimension_numbers = #tpu.dot_dimension_numbers<[1], [0], [0], [1], [0, 0, 1, 1], [], []>} : vector<32x512xf32>, vector<512x128xf32>, vector<32x128xf32> -> vector<32x128xf32>
    %c0_3 = arith.constant 0 : index
    %c0_4 = arith.constant 0 : index
    %3 = vector.load %arg3[%c0_3, %c0_4] : memref<32x128xf32, #tpu.memory_space<vmem>>, vector<32x128xf32>
    tpu.vector_store %arg3[%c0_3, %c0_4], %2 {strides = array<i32>} : memref<32x128xf32, #tpu.memory_space<vmem>>, vector<32x128xf32>,
    return
  }
  func.func @transform_0(%arg0: i32) -> (i32, i32) {
    %c0_i32 = arith.constant 0 : i32
    %c0_i32_0 = arith.constant 0 : i32
    return %arg0, %c0_i32 : i32, i32
  }
  func.func @transform_1(%arg0: i32) -> (i32, i32) {
    %c0_i32 = arith.constant 0 : i32
    %c0_i32_0 = arith.constant 0 : i32
    %c0_i32_1 = arith.constant 0 : i32
    return %c0_i32, %c0_i32_0 : i32, i32
  }
  func.func @transform_2(%arg0: i32) -> (i32, i32) {
    %c0_i32 = arith.constant 0 : i32
    %c0_i32_0 = arith.constant 0 : i32
    return %arg0, %c0_i32 : i32, i32
  }
}

</mosaic_0001>

<llo_original>
// kernel: rel_pos_emb_forward.1
$region0: #{rel_pos_emb_forward.1}
  #allocation0 [shape = 'u32[]', space=smem, size = 0x4, offset = 0x4, fixed_abs, tag = 'smem constant byte address 0x4 - core index']
  #allocation1 [shape = 'u32[144,128]{1,0:T(1,128)}', space=vmem, size = 0x12000, scoped, tag = 'internal scratch']
  %s0 = inlined_call_operand.vmem [shape: f32[64,512], index: 0, kind: input, shape index: {}]
  %s1 = inlined_call_operand.vmem [shape: f32[512,128], index: 1, kind: input, shape index: {}]
  %s2 = inlined_call_operand.vmem [shape: f32[64,128], index: 2, kind: output, shape index: {}]
  %s3 = sld [smem:[#allocation0]]
  $region41: #{rel_pos_emb_forward.1} parent=0
    _
  %s5 = ssub.s32 1, %s3
  %s6 = scalar_select 0, %s5, %s3
  loop: start=0, step=1, limit=4
  $region2: #{rel_pos_emb_forward.1} parent=0 // loop_pre_header
    _
  $region3: #{rel_pos_emb_forward.1} parent=0 // loop_header
    %s8 = sphi 0, %s12
    %p9 = scmp.ge.s32.totalorder %s8, 4
    %s18 = sphi 0, %s20
    %s21 = sphi 0, %s18
    %s22 = sphi 0, %s21
    %s38 = sphi 0, %s22
    %s42 = sphi 0, %s42
    %s44 = sphi 0, %s42
    %s45 = sphi 0, %s44
    %s59 = sphi 0, %s45
    %s65 = sphi 0, %s67
    %s68 = sphi 0, %s65
    %s69 = sphi 0, %s68
    %s85 = sphi 0, %s69
  $region4: #{rel_pos_emb_forward.1} parent=0 // loop_header_branch
    %11 = sbr.rel (%p9) target = $region8
  $region5: #{rel_pos_emb_forward.1} parent=0 // loop_body
    %s13 = ssub.s32 %s8, 1
    %s14 = ssub.s32 %s8, 2
    %s15 = sadd.s32 %s8, 1
    %s16 = ssub.s32 %s8, %s15
    %p17 = scmp.eq.s32.totalorder %s16, 0
    %s19 = sadd.s32 %s18, 1
    %s20 = scalar_select %p17, %s18, %s19
    %p23 = pneg %p17
    %p24 = scmp.eq.s32.totalorder %s8, 1
    %p25 = por %p23, %p24
    %p26 = scmp.ne.s32.totalorder %s18, %s21
    %p27 = scmp.eq.s32.totalorder %s8, 0
    %p28 = por %p26, %p27
    %p29 = scmp.ne.s32.totalorder %s18, %s21
    %p30 = scmp.eq.s32.totalorder %s13, 1
    %p31 = por %p29, %p30
    %p32 = scmp.ne.s32.totalorder %s21, %s22
    %p33 = scmp.eq.s32.totalorder %s13, 0
    %p34 = por %p32, %p33
    %p35 = scmp.ne.s32.totalorder %s21, %s22
    %p36 = scmp.eq.s32.totalorder %s14, 1
    %p37 = por %p35, %p36
    %p39 = scmp.ne.s32.totalorder %s22, %s38
    %p40 = scmp.eq.s32.totalorder %s14, 0
    %p41 = por %p39, %p40
    %s43 = sadd.s32 %s42, 1
    %p46 = scmp.eq.s32.totalorder %s8, 1
    %p47 = scmp.ne.s32.totalorder %s42, %s44
    %p48 = scmp.eq.s32.totalorder %s8, 0
    %p49 = por %p47, %p48
    %p50 = scmp.ne.s32.totalorder %s42, %s44
    %p51 = scmp.eq.s32.totalorder %s13, 1
    %p52 = por %p50, %p51
    %p53 = scmp.ne.s32.totalorder %s44, %s45
    %p54 = scmp.eq.s32.totalorder %s13, 0
    %p55 = por %p53, %p54
    %p56 = scmp.ne.s32.totalorder %s44, %s45
    %p57 = scmp.eq.s32.totalorder %s14, 1
    %p58 = por %p56, %p57
    %p60 = scmp.ne.s32.totalorder %s45, %s59
    %p61 = scmp.eq.s32.totalorder %s14, 0
    %p62 = por %p60, %p61
    %s63 = ssub.s32 %s8, %s15
    %p64 = scmp.eq.s32.totalorder %s63, 0
    %s66 = sadd.s32 %s65, 1
    %s67 = scalar_select %p64, %s65, %s66
    %p70 = pneg %p64
    %p71 = scmp.eq.s32.totalorder %s8, 1
    %p72 = por %p70, %p71
    %p73 = scmp.ne.s32.totalorder %s65, %s68
    %p74 = scmp.eq.s32.totalorder %s8, 0
    %p75 = por %p73, %p74
    %p76 = scmp.ne.s32.totalorder %s65, %s68
    %p77 = scmp.eq.s32.totalorder %s13, 1
    %p78 = por %p76, %p77
    %p79 = scmp.ne.s32.totalorder %s68, %s69
    %p80 = scmp.eq.s32.totalorder %s13, 0
    %p81 = por %p79, %p80
    %p82 = scmp.ne.s32.totalorder %s68, %s69
    %p83 = scmp.eq.s32.totalorder %s14, 1
    %p84 = por %p82, %p83
    %p86 = scmp.ne.s32.totalorder %s69, %s85
    %p87 = scmp.eq.s32.totalorder %s14, 0
    %p88 = por %p86, %p87
    %p89 = scmp.le.s32.totalorder 1, %s8
    %p90 = scmp.lt.s32.totalorder %s8, 3
    %p91 = pnand %p89, %p90
    %p92 = pneg %p91
    // Predicated region
    $region9: #{rel_pos_emb_forward.1} parent=5 // pred_check
      _
    $region10: #{rel_pos_emb_forward.1} parent=5 // pred_check_branch
      %94 = sbr.rel (%p91) target = $region12
    $region11: #{rel_pos_emb_forward.1} parent=5 // pred_region
      %s95 = ssub.s32 %s8, 1
      // Predicated region
      $region13: #{rel_pos_emb_forward.1} parent=11 // pred_check
        %p96 = pneg %p55
      $region14: #{rel_pos_emb_forward.1} parent=11 // pred_check_branch
        %98 = sbr.rel (%p96) target = $region16
      $region15: #{rel_pos_emb_forward.1} parent=11 // pred_region
        _
      $region16: #{rel_pos_emb_forward.1} parent=11 // pred_fallthru
        _
    $region12: #{rel_pos_emb_forward.1} parent=5 // pred_fallthru
      _
    %p99 = scmp.lt.s32.totalorder %s8, 2
    // Predicated region
    $region17: #{rel_pos_emb_forward.1} parent=5 // pred_check
      %p100 = pneg %p99
    $region18: #{rel_pos_emb_forward.1} parent=5 // pred_check_branch
      %102 = sbr.rel (%p100) target = $region20
    $region19: #{rel_pos_emb_forward.1} parent=5 // pred_region
      // Predicated region
      $region21: #{rel_pos_emb_forward.1} parent=19 // pred_check
        %p103 = pneg %p28
      $region22: #{rel_pos_emb_forward.1} parent=19 // pred_check_branch
        %105 = sbr.rel (%p103) target = $region24
      $region23: #{rel_pos_emb_forward.1} parent=19 // pred_region
        %s106 = smul.u32 4, %s8
        %p107 = scmp.lt.s32.totalorder %s106, 7
        %s108 = scalar_select %p107, %s106, 7
        %s109 = smul.addr %s108, 4
        %s110 = smul.addr %s109, 8
        %s111 = scalar_lea.vmem %s0, %s110
        %s112 = smul.u32 4, %s8
      $region24: #{rel_pos_emb_forward.1} parent=19 // pred_fallthru
        _
    $region20: #{rel_pos_emb_forward.1} parent=5 // pred_fallthru
      _
    %p113 = scmp.le.s32.totalorder 1, %s8
    %p114 = scmp.lt.s32.totalorder %s8, 3
    %p115 = pnand %p113, %p114
    %p116 = pneg %p115
    // Predicated region
    $region25: #{rel_pos_emb_forward.1} parent=5 // pred_check
      _
    $region26: #{rel_pos_emb_forward.1} parent=5 // pred_check_branch
      %118 = sbr.rel (%p115) target = $region28
    $region27: #{rel_pos_emb_forward.1} parent=5 // pred_region
      %s119 = ssub.s32 %s8, 1
      %s120 = smul.u32 4, %s13
      %p121 = scmp.lt.s32.totalorder %s120, 7
      %s122 = scalar_select %p121, %s120, 7
      %s123 = smul.addr %s122, 4
      %s124 = smul.addr %s123, 8
      %s125 = scalar_lea.vmem %s0, %s124
      %p126 = pneg %p34
      %p127 = pneg %p31
      %p128 = pneg %p55
      %p129 = pneg %p52
      %p130 = pneg %p81
      %p131 = pneg %p78
      %s132 = smul.u32 4, %s13
      %p133 = scmp.lt.s32.totalorder %s132, 7
      %s134 = scalar_select %p133, %s132, 7
      %s135 = smul.addr %s134, 8
      %s136 = scalar_lea.vmem %s2, %s135
      %s137 = smul.u32 4, %s13
      %p138 = scmp.lt.s32.totalorder %s137, 7
      %s139 = scalar_select %p138, %s137, 7
      %s140 = smul.addr %s139, 4
      %s141 = smul.addr %s140, 8
      %s142 = scalar_lea.vmem %s0, %s141
      %s143 = smul.u32 4, %s13
      %s144 = smul.u32 4, %s13
      %p145 = scmp.lt.s32.totalorder %s144, 7
      %s146 = scalar_select %p145, %s144, 7
      %s147 = smul.addr %s146, 8
      %s148 = scalar_lea.vmem %s2, %s147
      %s149 = smul.u32 4, %s13
      %v150 = vld [vmem:[%s142] sm:$0xff]
      %v151 = vld [vmem:[%s142 + $0x8] sm:$0xff]
      %v152 = vld [vmem:[%s142 + $0x10] sm:$0xff]
      %v153 = vld [vmem:[%s142 + $0x18] sm:$0xff]
      %v154 = vld [vmem:[%s142 + $0x20] sm:$0xff]
      %v155 = vld [vmem:[%s142 + $0x28] sm:$0xff]
      %v156 = vld [vmem:[%s142 + $0x30] sm:$0xff]
      %v157 = vld [vmem:[%s142 + $0x38] sm:$0xff]
      %v158 = vld [vmem:[%s142 + $0x40] sm:$0xff]
      %v159 = vld [vmem:[%s142 + $0x48] sm:$0xff]
      %v160 = vld [vmem:[%s142 + $0x50] sm:$0xff]
      %v161 = vld [vmem:[%s142 + $0x58] sm:$0xff]
      %v162 = vld [vmem:[%s142 + $0x60] sm:$0xff]
      %v163 = vld [vmem:[%s142 + $0x68] sm:$0xff]
      %v164 = vld [vmem:[%s142 + $0x70] sm:$0xff]
      %v165 = vld [vmem:[%s142 + $0x78] sm:$0xff]
      %v166 = vld [vmem:[%s1] sm:$0xff]
      %v167 = vld [vmem:[%s1 + $0x8] sm:$0xff]
      %v168 = vld [vmem:[%s1 + $0x10] sm:$0xff]
      %v169 = vld [vmem:[%s1 + $0x18] sm:$0xff]
      %v170 = vld [vmem:[%s1 + $0x20] sm:$0xff]
      %v171 = vld [vmem:[%s1 + $0x28] sm:$0xff]
      %v172 = vld [vmem:[%s1 + $0x30] sm:$0xff]
      %v173 = vld [vmem:[%s1 + $0x38] sm:$0xff]
      %v174 = vld [vmem:[%s1 + $0x40] sm:$0xff]
      %v175 = vld [vmem:[%s1 + $0x48] sm:$0xff]
      %v176 = vld [vmem:[%s1 + $0x50] sm:$0xff]
      %v177 = vld [vmem:[%s1 + $0x58] sm:$0xff]
      %v178 = vld [vmem:[%s1 + $0x60] sm:$0xff]
      %v179 = vld [vmem:[%s1 + $0x68] sm:$0xff]
      %v180 = vld [vmem:[%s1 + $0x70] sm:$0xff]
      %v181 = vld [vmem:[%s1 + $0x78] sm:$0xff]
      %v182 = vld [vmem:[%s1 + $0x80] sm:$0xff]
      %v183 = vld [vmem:[%s1 + $0x88] sm:$0xff]
      %v184 = vld [vmem:[%s1 + $0x90] sm:$0xff]
      %v185 = vld [vmem:[%s1 + $0x98] sm:$0xff]
      %v186 = vld [vmem:[%s1 + $0xa0] sm:$0xff]
      %v187 = vld [vmem:[%s1 + $0xa8] sm:$0xff]
      %v188 = vld [vmem:[%s1 + $0xb0] sm:$0xff]
      %v189 = vld [vmem:[%s1 + $0xb8] sm:$0xff]
      %v190 = vld [vmem:[%s1 + $0xc0] sm:$0xff]
      %v191 = vld [vmem:[%s1 + $0xc8] sm:$0xff]
      %v192 = vld [vmem:[%s1 + $0xd0] sm:$0xff]
      %v193 = vld [vmem:[%s1 + $0xd8] sm:$0xff]
      %v194 = vld [vmem:[%s1 + $0xe0] sm:$0xff]
      %v195 = vld [vmem:[%s1 + $0xe8] sm:$0xff]
      %v196 = vld [vmem:[%s1 + $0xf0] sm:$0xff]
      %v197 = vld [vmem:[%s1 + $0xf8] sm:$0xff]
      %v198 = vld [vmem:[%s1 + $0x100] sm:$0xff]
      %v199 = vld [vmem:[%s1 + $0x108] sm:$0xff]
      %v200 = vld [vmem:[%s1 + $0x110] sm:$0xff]
      %v201 = vld [vmem:[%s1 + $0x118] sm:$0xff]
      %v202 = vld [vmem:[%s1 + $0x120] sm:$0xff]
      %v203 = vld [vmem:[%s1 + $0x128] sm:$0xff]
      %v204 = vld [vmem:[%s1 + $0x130] sm:$0xff]
      %v205 = vld [vmem:[%s1 + $0x138] sm:$0xff]
      %v206 = vld [vmem:[%s1 + $0x140] sm:$0xff]
      %v207 = vld [vmem:[%s1 + $0x148] sm:$0xff]
      %v208 = vld [vmem:[%s1 + $0x150] sm:$0xff]
      %v209 = vld [vmem:[%s1 + $0x158] sm:$0xff]
      %v210 = vld [vmem:[%s1 + $0x160] sm:$0xff]
      %v211 = vld [vmem:[%s1 + $0x168] sm:$0xff]
      %v212 = vld [vmem:[%s1 + $0x170] sm:$0xff]
      %v213 = vld [vmem:[%s1 + $0x178] sm:$0xff]
      %v214 = vld [vmem:[%s1 + $0x180] sm:$0xff]
      %v215 = vld [vmem:[%s1 + $0x188] sm:$0xff]
      %v216 = vld [vmem:[%s1 + $0x190] sm:$0xff]
      %v217 = vld [vmem:[%s1 + $0x198] sm:$0xff]
      %v218 = vld [vmem:[%s1 + $0x1a0] sm:$0xff]
      %v219 = vld [vmem:[%s1 + $0x1a8] sm:$0xff]
      %v220 = vld [vmem:[%s1 + $0x1b0] sm:$0xff]
      %v221 = vld [vmem:[%s1 + $0x1b8] sm:$0xff]
      %v222 = vld [vmem:[%s1 + $0x1c0] sm:$0xff]
      %v223 = vld [vmem:[%s1 + $0x1c8] sm:$0xff]
      %v224 = vld [vmem:[%s1 + $0x1d0] sm:$0xff]
      %v225 = vld [vmem:[%s1 + $0x1d8] sm:$0xff]
      %v226 = vld [vmem:[%s1 + $0x1e0] sm:$0xff]
      %v227 = vld [vmem:[%s1 + $0x1e8] sm:$0xff]
      %v228 = vld [vmem:[%s1 + $0x1f0] sm:$0xff]
      %v229 = vld [vmem:[%s1 + $0x1f8] sm:$0xff]
      %230 = vmatprep.subr.mxu0 0.0
      %231 = vmatpush1.msra.mxu0 %v181
      %232 = vmatprep.subr.mxu0 0.0
      %233 = vmatpush1.msra.mxu0 %v180
      %234 = vmatprep.subr.mxu0 0.0
      %235 = vmatpush1.msra.mxu0 %v179
      %236 = vmatprep.subr.mxu0 0.0
      %237 = vmatpush1.msra.mxu0 %v178
      %238 = vmatprep.subr.mxu0 0.0
      %239 = vmatpush1.msra.mxu0 %v177
      %240 = vmatprep.subr.mxu0 0.0
      %241 = vmatpush1.msra.mxu0 %v176
      %242 = vmatprep.subr.mxu0 0.0
      %243 = vmatpush1.msra.mxu0 %v175
      %244 = vmatprep.subr.mxu0 0.0
      %245 = vmatpush1.msra.mxu0 %v174
      %246 = vmatprep.subr.mxu0 0.0
      %247 = vmatpush1.msra.mxu0 %v173
      %248 = vmatprep.subr.mxu0 0.0
      %249 = vmatpush1.msra.mxu0 %v172
      %250 = vmatprep.subr.mxu0 0.0
      %251 = vmatpush1.msra.mxu0 %v171
      %252 = vmatprep.subr.mxu0 0.0
      %253 = vmatpush1.msra.mxu0 %v170
      %254 = vmatprep.subr.mxu0 0.0
      %255 = vmatpush1.msra.mxu0 %v169
      %256 = vmatprep.subr.mxu0 0.0
      %257 = vmatpush1.msra.mxu0 %v168
      %258 = vmatprep.subr.mxu0 0.0
      %259 = vmatpush1.msra.mxu0 %v167
      %260 = vmatprep.subr.mxu0 0.0
      %261 = vmatpush1.msra.mxu0 %v166
      %262 = vmatprep.subr.mxu0 0.0
      %263 = vmatpush2.msra.mxu0 %v197
      %264 = vmatprep.subr.mxu0 0.0
      %265 = vmatpush2.msra.mxu0 %v196
      %266 = vmatprep.subr.mxu0 0.0
      %267 = vmatpush2.msra.mxu0 %v195
      %268 = vmatprep.subr.mxu0 0.0
      %269 = vmatpush2.msra.mxu0 %v194
      %270 = vmatprep.subr.mxu0 0.0
      %271 = vmatpush2.msra.mxu0 %v193
      %272 = vmatprep.subr.mxu0 0.0
      %273 = vmatpush2.msra.mxu0 %v192
      %274 = vmatprep.subr.mxu0 0.0
      %275 = vmatpush2.msra.mxu0 %v191
      %276 = vmatprep.subr.mxu0 0.0
      %277 = vmatpush2.msra.mxu0 %v190
      %278 = vmatprep.subr.mxu0 0.0
      %279 = vmatpush2.msra.mxu0 %v189
      %280 = vmatprep.subr.mxu0 0.0
      %281 = vmatpush2.msra.mxu0 %v188
      %282 = vmatprep.subr.mxu0 0.0
      %283 = vmatpush2.msra.mxu0 %v187
      %284 = vmatprep.subr.mxu0 0.0
      %285 = vmatpush2.msra.mxu0 %v186
      %286 = vmatprep.subr.mxu0 0.0
      %287 = vmatpush2.msra.mxu0 %v185
      %288 = vmatprep.subr.mxu0 0.0
      %289 = vmatpush2.msra.mxu0 %v184
      %290 = vmatprep.subr.mxu0 0.0
      %291 = vmatpush2.msra.mxu0 %v183
      %292 = vmatprep.subr.mxu0 0.0
      %293 = vmatpush2.msra.mxu0 %v182
      %294 = vmatprep.mubr.f32.mxu0 %v151
      %295 = vmatmul.mubr.f32.gmra.mxu0 %v150
      %v296 = vpop.f32.mrf.mxu0
      %v297 = vadd.f32 0.0, %v296
      %v298 = vpop.f32.mrf.mxu0
      %299 = vmatprep.mubr.f32.mxu0 %v155
      %300 = vmatmul.mubr.f32.gmra.mxu0 %v154
      %v301 = vpop.f32.mrf.mxu0
      %v302 = vadd.f32 0.0, %v301
      %v303 = vpop.f32.mrf.mxu0
      %304 = vmatprep.mubr.f32.mxu0 %v159
      %305 = vmatmul.mubr.f32.gmra.mxu0 %v158
      %v306 = vpop.f32.mrf.mxu0
      %v307 = vadd.f32 0.0, %v306
      %v308 = vpop.f32.mrf.mxu0
      %309 = vmatprep.mubr.f32.mxu0 %v163
      %310 = vmatmul.mubr.f32.gmra.mxu0 %v162
      %v311 = vpop.f32.mrf.mxu0
      %v312 = vadd.f32 0.0, %v311
      %v313 = vpop.f32.mrf.mxu0
      %314 = vdwg.mxu0
      %315 = vmatprep.subr.mxu0 0.0
      %316 = vmatpush1.msra.mxu0 %v213
      %317 = vmatprep.subr.mxu0 0.0
      %318 = vmatpush1.msra.mxu0 %v212
      %319 = vmatprep.subr.mxu0 0.0
      %320 = vmatpush1.msra.mxu0 %v211
      %321 = vmatprep.subr.mxu0 0.0
      %322 = vmatpush1.msra.mxu0 %v210
      %323 = vmatprep.subr.mxu0 0.0
      %324 = vmatpush1.msra.mxu0 %v209
      %325 = vmatprep.subr.mxu0 0.0
      %326 = vmatpush1.msra.mxu0 %v208
      %327 = vmatprep.subr.mxu0 0.0
      %328 = vmatpush1.msra.mxu0 %v207
      %329 = vmatprep.subr.mxu0 0.0
      %330 = vmatpush1.msra.mxu0 %v206
      %331 = vmatprep.subr.mxu0 0.0
      %332 = vmatpush1.msra.mxu0 %v205
      %333 = vmatprep.subr.mxu0 0.0
      %334 = vmatpush1.msra.mxu0 %v204
      %335 = vmatprep.subr.mxu0 0.0
      %336 = vmatpush1.msra.mxu0 %v203
      %337 = vmatprep.subr.mxu0 0.0
      %338 = vmatpush1.msra.mxu0 %v202
      %339 = vmatprep.subr.mxu0 0.0
      %340 = vmatpush1.msra.mxu0 %v201
      %341 = vmatprep.subr.mxu0 0.0
      %342 = vmatpush1.msra.mxu0 %v200
      %343 = vmatprep.subr.mxu0 0.0
      %344 = vmatpush1.msra.mxu0 %v199
      %345 = vmatprep.subr.mxu0 0.0
      %346 = vmatpush1.msra.mxu0 %v198
      %347 = vmatprep.subr.mxu0 0.0
      %348 = vmatpush2.msra.mxu0 %v229
      %349 = vmatprep.subr.mxu0 0.0
      %350 = vmatpush2.msra.mxu0 %v228
      %351 = vmatprep.subr.mxu0 0.0
      %352 = vmatpush2.msra.mxu0 %v227
      %353 = vmatprep.subr.mxu0 0.0
      %354 = vmatpush2.msra.mxu0 %v226
      %355 = vmatprep.subr.mxu0 0.0
      %356 = vmatpush2.msra.mxu0 %v225
      %357 = vmatprep.subr.mxu0 0.0
      %358 = vmatpush2.msra.mxu0 %v224
      %359 = vmatprep.subr.mxu0 0.0
      %360 = vmatpush2.msra.mxu0 %v223
      %361 = vmatprep.subr.mxu0 0.0
      %362 = vmatpush2.msra.mxu0 %v222
      %363 = vmatprep.subr.mxu0 0.0
      %364 = vmatpush2.msra.mxu0 %v221
      %365 = vmatprep.subr.mxu0 0.0
      %366 = vmatpush2.msra.mxu0 %v220
      %367 = vmatprep.subr.mxu0 0.0
      %368 = vmatpush2.msra.mxu0 %v219
      %369 = vmatprep.subr.mxu0 0.0
      %370 = vmatpush2.msra.mxu0 %v218
      %371 = vmatprep.subr.mxu0 0.0
      %372 = vmatpush2.msra.mxu0 %v217
      %373 = vmatprep.subr.mxu0 0.0
      %374 = vmatpush2.msra.mxu0 %v216
      %375 = vmatprep.subr.mxu0 0.0
      %376 = vmatpush2.msra.mxu0 %v215
      %377 = vmatprep.subr.mxu0 0.0
      %378 = vmatpush2.msra.mxu0 %v214
      %379 = vmatprep.mubr.f32.mxu0 %v153
      %380 = vmatmul.mubr.f32.gmra.mxu0 %v152
      %v381 = vpop.f32.mrf.mxu0
      %v382 = vadd.f32 %v297, %v381
      %v383 = vpop.f32.mrf.mxu0
      %384 = vmatprep.mubr.f32.mxu0 %v157
      %385 = vmatmul.mubr.f32.gmra.mxu0 %v156
      %v386 = vpop.f32.mrf.mxu0
      %v387 = vadd.f32 %v302, %v386
      %v388 = vpop.f32.mrf.mxu0
      %389 = vmatprep.mubr.f32.mxu0 %v161
      %390 = vmatmul.mubr.f32.gmra.mxu0 %v160
      %v391 = vpop.f32.mrf.mxu0
      %v392 = vadd.f32 %v307, %v391
      %v393 = vpop.f32.mrf.mxu0
      %394 = vmatprep.mubr.f32.mxu0 %v165
      %395 = vmatmul.mubr.f32.gmra.mxu0 %v164
      %v396 = vpop.f32.mrf.mxu0
      %v397 = vadd.f32 %v312, %v396
      %v398 = vpop.f32.mrf.mxu0
      %399 = vdwg.mxu0
      %400 = vst [vmem:[%s148] sm:$0xff] %v382
      %401 = vst [vmem:[%s148 + $0x8] sm:$0xff] %v387
      %402 = vst [vmem:[%s148 + $0x10] sm:$0xff] %v392
      %403 = vst [vmem:[%s148 + $0x18] sm:$0xff] %v397
      %s404 = smul.u32 4, %s13
      %p405 = scmp.lt.s32.totalorder %s404, 7
      %s406 = scalar_select %p405, %s404, 7
      %s407 = smul.addr %s406, 8
      %s408 = scalar_lea.vmem %s2, %s407
      // Predicated region
      $region29: #{rel_pos_emb_forward.1} parent=27 // pred_check
        %p409 = pneg %p78
      $region30: #{rel_pos_emb_forward.1} parent=27 // pred_check_branch
        %411 = sbr.rel (%p409) target = $region32
      $region31: #{rel_pos_emb_forward.1} parent=27 // pred_region
        %s412 = smul.u32 4, %s13
      $region32: #{rel_pos_emb_forward.1} parent=27 // pred_fallthru
        _
    $region28: #{rel_pos_emb_forward.1} parent=5 // pred_fallthru
      _
    %p413 = scmp.le.s32.totalorder 2, %s8
    // Predicated region
    $region33: #{rel_pos_emb_forward.1} parent=5 // pred_check
      %p414 = pneg %p413
    $region34: #{rel_pos_emb_forward.1} parent=5 // pred_check_branch
      %416 = sbr.rel (%p414) target = $region36
    $region35: #{rel_pos_emb_forward.1} parent=5 // pred_region
      %s417 = ssub.s32 %s8, 2
      // Predicated region
      $region37: #{rel_pos_emb_forward.1} parent=35 // pred_check
        %p418 = pneg %p84
      $region38: #{rel_pos_emb_forward.1} parent=35 // pred_check_branch
        %420 = sbr.rel (%p418) target = $region40
      $region39: #{rel_pos_emb_forward.1} parent=35 // pred_region
        %s421 = smul.u32 4, %s14
        %p422 = scmp.lt.s32.totalorder %s421, 7
        %s423 = scalar_select %p422, %s421, 7
        %s424 = smul.addr %s423, 8
        %s425 = scalar_lea.vmem %s2, %s424
      $region40: #{rel_pos_emb_forward.1} parent=35 // pred_fallthru
        _
    $region36: #{rel_pos_emb_forward.1} parent=5 // pred_fallthru
      _
  $region6: #{rel_pos_emb_forward.1} parent=0 // loop_footer
    %s12 = sadd.s32 1, %s8
  $region7: #{rel_pos_emb_forward.1} parent=0 // loop_footer_branch
    %7 = sbr.rel target = $region3
  $region8: #{rel_pos_emb_forward.1} parent=0 // loop_exit
    _

</llo_original>
